<compile_context>
chip_gen: v6e
topology: v6e:2x2x1
jax: 0.10.0
libtpu: 0.0.40
codegen_flags: <defaults>
</compile_context>

<pallas_src>
import functools
import math

import jax
import jax.numpy as jnp
from jax.experimental import pallas as pl
from jax.experimental.pallas import tpu as pltpu


def _round_up(a, b):
    return (a + b - 1) // b * b


def _cdiv(a, b):
    return (a + b - 1) // b


def _vmem_capacity_bytes():
    """Physical VMEM of the current chip; conservative 64 MiB (v7x) fallback."""
    try:
        return int(pltpu.get_tpu_info().vmem_capacity_bytes)
    except Exception:
        return 64 << 20


def _vmem_need_bytes(tm, th, tn, in_f_p, x_isz, w_isz, out_isz):
    per_buffer = (tm * in_f_p * x_isz      # x tile
                  + in_f_p * th * w_isz    # W1 chunk
                  + th * tn * w_isz        # W2 chunk
                  + (th + tn) * 4          # bias chunks (f32)
                  + tm * tn * out_isz)     # output tile
    return 2 * per_buffer + tm * tn * 4    # double-buffered + f32 accumulator


def _mlp_kernel(x_ref, w1_ref, b1_ref, w2_ref, b2_ref, o_ref, acc_ref,
                *, mxu_dtype, approximate_gelu):
    k = pl.program_id(2)

    @pl.when(k == 0)
    def _init():
        # Fold the second bias into the accumulator init (saves one full
        # (tm, tn) VPU add per grid step).
        acc_ref[...] = jnp.broadcast_to(
            b2_ref[...].astype(jnp.float32), acc_ref.shape)

    # First linear, partial over the hidden chunk. MXU is fed `mxu_dtype`
    # (bf16 by default) and accumulates in f32.
    h = jnp.dot(x_ref[...].astype(mxu_dtype),
                w1_ref[...].astype(mxu_dtype),
                preferred_element_type=jnp.float32)
    h = h + b1_ref[...].astype(jnp.float32)

    if approximate_gelu:
        # tanh GELU lowers to the EUP slot (nearly free next to bf16 matmuls)
        # but deviates slightly from nn.GELU()'s exact erf.
        h = jax.nn.gelu(h, approximate=True)
    else:
        # Exact erf GELU — matches nn.GELU() default.
        h = 0.5 * h * (1.0 + jax.lax.erf(h * (1.0 / math.sqrt(2.0))))

    # Dropout with p=0.0 is the identity.
    # TODO(synk): dropout with p > 0 (training mode) not implemented; p=0 here.

    # Second linear, accumulated over hidden chunks in f32.
    acc_ref[...] += jnp.dot(h.astype(mxu_dtype),
                            w2_ref[...].astype(mxu_dtype),
                            preferred_element_type=jnp.float32)

    @pl.when(k == pl.num_programs(2) - 1)
    def _finalize():
        o_ref[...] = acc_ref[...].astype(o_ref.dtype)


def prepare_mlp_params(w1, b1, w2, b2, *, mxu_dtype=jnp.bfloat16,
                       tm_hint=512, vmem_frac=0.85):
    """Pad + cast parameters ONCE (hoisted out of the per-call path) and pick
    hidden / out_features tile sizes against the chip's VMEM capacity.

    w1: (in_f, hid), b1: (hid,) or (1, hid)
    w2: (hid, out),  b2: (out,) or (1, out)
    """
    in_f, hid = w1.shape
    hid2, out_f = w2.shape
    assert hid2 == hid
    mxu_dtype = jnp.dtype(mxu_dtype)
    w_isz = mxu_dtype.itemsize

    in_f_p = _round_up(in_f, 128)
    hid_128 = _round_up(hid, 128)
    out_128 = _round_up(out_f, 128)

    vmem_cap = _vmem_capacity_bytes()
    budget = int(vmem_frac * vmem_cap) - (4 << 20)

    # Initial tile targets, 256-aligned (MXU-native on v6e/v7x) where possible.
    th = min(1024 if w_isz <= 2 else 512, hid_128)
    tn = min(2048, out_128)
    # Shrink hidden / out tiles until a nominal-tm step fits the VMEM budget
    # (x / output assumed f32 here to stay conservative across call dtypes).
    while (_vmem_need_bytes(tm_hint, th, tn, in_f_p, 4, w_isz, 4) > budget
           and (th > 256 or tn > 256)):
        if th >= tn and th > 256:
            th = max(256, th // 2)
        elif tn > 256:
            tn = max(256, tn // 2)
        else:
            break
    th = min(th, hid_128)
    tn = min(tn, out_128)

    hid_p = _round_up(hid, th)
    out_f_p = _round_up(out_f, tn)

    b1 = jnp.asarray(b1).reshape(1, -1)
    b2 = jnp.asarray(b2).reshape(1, -1)

    # Zero padding contributes exactly zero to every dot product.
    w1p = jnp.pad(w1, ((0, in_f_p - in_f), (0, hid_p - hid))).astype(mxu_dtype)
    b1p = jnp.pad(b1, ((0, 0), (0, hid_p - hid))).astype(jnp.float32)
    w2p = jnp.pad(w2, ((0, hid_p - hid), (0, out_f_p - out_f))).astype(mxu_dtype)
    b2p = jnp.pad(b2, ((0, 0), (0, out_f_p - out_f))).astype(jnp.float32)

    return dict(w1=w1p, b1=b1p, w2=w2p, b2=b2p,
                dims=(in_f, hid, out_f), tiles=(th, tn), mxu_dtype=mxu_dtype)


def mlp_forward(x, params, *, tm=None, approximate_gelu=False):
    """MLP forward. x: (M, in_features) -> (M, out_features)."""
    M, in_f = x.shape
    in_f0, hid, out_f = params["dims"]
    assert in_f == in_f0, (in_f, in_f0)
    w1p, b1p, w2p, b2p = params["w1"], params["b1"], params["w2"], params["b2"]
    th, tn = params["tiles"]
    mxu_dtype = params["mxu_dtype"]

    in_f_p, hid_p = w1p.shape
    out_f_p = w2p.shape[1]

    out_dtype = x.dtype
    x_isz = jnp.dtype(x.dtype).itemsize
    out_isz = jnp.dtype(out_dtype).itemsize
    w_isz = jnp.dtype(mxu_dtype).itemsize

    vmem_cap = _vmem_capacity_bytes()
    vmem_hi = int(0.9 * vmem_cap)
    budget = vmem_hi - (4 << 20)

    # Row tile: bf16 packs 16 rows per vreg sublane group; big tm cuts the
    # number of times W1/W2 are re-streamed from HBM (dominant DMA cost).
    row_align = 16 if (w_isz <= 2 or x_isz <= 2) else 8
    m_r = _round_up(M, row_align)
    if tm is None:
        tm = 512 if x_isz >= 4 else 1024
    tm_eff = max(row_align, _round_up(min(tm, m_r), row_align))
    while (tm_eff > row_align and
           _vmem_need_bytes(tm_eff, th, tn, in_f_p, x_isz, w_isz, out_isz)
           > budget):
        tm_eff = max(row_align, _round_up(tm_eff // 2, row_align))

    # Megacore (v7x has 2 TensorCores): if the grid has only one parallel
    # block and the row count is big enough, split the row tile in two.
    n_j = out_f_p // tn
    n_i = _cdiv(m_r, tm_eff)
    if n_i * n_j < 2 and m_r >= max(2 * row_align, 256):
        tm_eff = _round_up(_cdiv(m_r, 2), row_align)

    m_p = _round_up(M, tm_eff)
    n_i = m_p // tm_eff
    n_k = hid_p // th

    # Pad x only when actually required (aligned fast path skips the copy).
    if m_p != M or in_f_p != in_f:
        xp = jnp.pad(x, ((0, m_p - M), (0, in_f_p - in_f)))
    else:
        xp = x

    vmem_need = _vmem_need_bytes(tm_eff, th, tn, in_f_p, x_isz, w_isz, out_isz)
    vmem_limit = int(min(max(vmem_need + (4 << 20), 16 << 20), vmem_hi))
    if vmem_limit < vmem_need:
        vmem_limit = int(min(vmem_need + (2 << 20), vmem_cap))

    # Real traffic: W1 is streamed once per (i, j) tile, W2 once per i tile,
    # x once, output written once.
    cost = pl.CostEstimate(
        flops=2 * m_p * (in_f_p * hid_p * n_j + hid_p * out_f_p),
        transcendentals=m_p * hid_p * n_j,
        bytes_accessed=int(m_p * in_f_p * x_isz
                           + n_i * n_j * w1p.size * w_isz
                           + n_i * w2p.size * w_isz
                           + n_i * n_j * (b1p.size + b2p.size) * 4
                           + m_p * out_f_p * out_isz),
    )

    kernel = functools.partial(_mlp_kernel, mxu_dtype=mxu_dtype,
                               approximate_gelu=approximate_gelu)

    out_p = pl.pallas_call(
        kernel,
        out_shape=jax.ShapeDtypeStruct((m_p, out_f_p), out_dtype),
        grid_spec=pltpu.PrefetchScalarGridSpec(
            num_scalar_prefetch=0,
            grid=(n_i, n_j, n_k),
            in_specs=[
                pl.BlockSpec((tm_eff, in_f_p), lambda i, j, k: (i, 0)),  # x
                pl.BlockSpec((in_f_p, th), lambda i, j, k: (0, k)),      # W1
                pl.BlockSpec((1, th), lambda i, j, k: (0, k)),           # b1
                pl.BlockSpec((th, tn), lambda i, j, k: (k, j)),          # W2
                pl.BlockSpec((1, tn), lambda i, j, k: (0, j)),           # b2
            ],
            out_specs=pl.BlockSpec((tm_eff, tn), lambda i, j, k: (i, j)),
            scratch_shapes=[pltpu.VMEM((tm_eff, tn), jnp.float32)],
        ),
        compiler_params=pltpu.CompilerParams(
            dimension_semantics=("parallel", "parallel", "arbitrary"),
            vmem_limit_bytes=vmem_limit,
        ),
        cost_estimate=cost,
    )(xp, w1p, b1p, w2p, b2p)

    if m_p != M or out_f_p != out_f:
        return out_p[:M, :out_f]
    return out_p


def init_linear_params(key, fan_in, fan_out):
    """PyTorch nn.Linear default init: U(-1/sqrt(fan_in), 1/sqrt(fan_in))."""
    kw, kb = jax.random.split(key)
    bound = 1.0 / math.sqrt(fan_in)
    # Stored as (fan_in, fan_out) so the kernel does x @ W directly.
    w = jax.random.uniform(kw, (fan_in, fan_out), jnp.float32, -bound, bound)
    b = jax.random.uniform(kb, (1, fan_out), jnp.float32, -bound, bound)
    return w, b


if __name__ == "__main__":
    batch, seq = 2, 8
    in_features, hidden_features, out_features = 32, 64, 32

    key = jax.random.PRNGKey(0)
    kx, k1, k2 = jax.random.split(key, 3)

    x = jax.random.normal(kx, (batch, seq, in_features), jnp.float32)
    w1, b1 = init_linear_params(k1, in_features, hidden_features)
    w2, b2 = init_linear_params(k2, hidden_features, out_features)

    x2d = x.reshape(batch * seq, in_features)

    # Plain-JAX reference (exact erf GELU; Dropout(p=0) is the identity).
    h_ref = x2d @ w1 + b1
    h_ref = 0.5 * h_ref * (1.0 + jax.lax.erf(h_ref / math.sqrt(2.0)))
    y_ref = (h_ref @ w2 + b2).reshape(batch, seq, out_features)

    # 1) Default fast path: bf16-fed MXU with f32 accumulation.
    params_bf16 = prepare_mlp_params(w1, b1, w2, b2, mxu_dtype=jnp.bfloat16)
    y_bf16 = mlp_forward(x2d, params_bf16).reshape(batch, seq, out_features)
    jax.block_until_ready(y_bf16)
    assert jnp.allclose(y_bf16, y_ref, atol=3e-2, rtol=3e-2), (
        float(jnp.max(jnp.abs(y_bf16 - y_ref))))

    # 2) f32 parity path (matches the PyTorch reference tightly).
    params_f32 = prepare_mlp_params(w1, b1, w2, b2, mxu_dtype=jnp.float32)
    y_f32 = mlp_forward(x2d, params_f32).reshape(batch, seq, out_features)
    jax.block_until_ready(y_f32)
    assert jnp.allclose(y_f32, y_ref, atol=1e-5, rtol=1e-5), (
        float(jnp.max(jnp.abs(y_f32 - y_ref))))

    print("KERNEL_OK")
</pallas_src>

<mosaic_0001>
module attributes {stable_mosaic.version = 11 : i64} {
  func.func @_mlp_kernel(%arg0: i32, %arg1: i32, %arg2: i32, %arg3: memref<16x128xf32, #tpu.memory_space<vmem>>, %arg4: memref<128x128xbf16, #tpu.memory_space<vmem>>, %arg5: memref<1x128xf32, #tpu.memory_space<vmem>>, %arg6: memref<128x128xbf16, #tpu.memory_space<vmem>>, %arg7: memref<1x128xf32, #tpu.memory_space<vmem>>, %arg8: memref<16x128xf32, #tpu.memory_space<vmem>>, %arg9: memref<16x128xf32, #tpu.memory_space<vmem>>) attributes {dimension_semantics = [#tpu.dimension_semantics<parallel>, #tpu.dimension_semantics<parallel>, #tpu.dimension_semantics<arbitrary>], iteration_bounds = array<i64: 1, 1, 1>, scalar_prefetch = 0 : i64, scratch_operands = 1 : i64, tpu.core_type = #tpu.core_type<tc>, window_params = [{transform_indices = @transform_0, window_bounds = array<i64: 16, 128>}, {transform_indices = @transform_1, window_bounds = array<i64: 128, 128>}, {transform_indices = @transform_2, window_bounds = array<i64: 1, 128>}, {transform_indices = @transform_3, window_bounds = array<i64: 128, 128>}, {transform_indices = @transform_4, window_bounds = array<i64: 1, 128>}, {transform_indices = @transform_5, window_bounds = array<i64: 16, 128>}]} {
    %c0_i32 = arith.constant 0 : i32
    %0 = arith.cmpi eq, %arg2, %c0_i32 : i32
    %1 = arith.extui %0 : i1 to i32
    %c0_i32_0 = arith.constant 0 : i32
    %2 = arith.cmpi ne, %1, %c0_i32_0 : i32
    scf.if %2 {
      %c0_18 = arith.constant 0 : index
      %c0_19 = arith.constant 0 : index
      %27 = vector.load %arg7[%c0_18, %c0_19] : memref<1x128xf32, #tpu.memory_space<vmem>>, vector<1x128xf32>
      %28 = vector.shape_cast %27 : vector<1x128xf32> to vector<1x128xf32>
      %29 = vector.broadcast %28 : vector<1x128xf32> to vector<16x128xf32>
      %c0_20 = arith.constant 0 : index
      %c0_21 = arith.constant 0 : index
      %30 = vector.load %arg9[%c0_20, %c0_21] : memref<16x128xf32, #tpu.memory_space<vmem>>, vector<16x128xf32>
      tpu.vector_store %arg9[%c0_20, %c0_21], %29 {strides = array<i32>} : memref<16x128xf32, #tpu.memory_space<vmem>>, vector<16x128xf32>,
    } else {
    }
    %c0 = arith.constant 0 : index
    %c0_1 = arith.constant 0 : index
    %3 = vector.load %arg3[%c0, %c0_1] : memref<16x128xf32, #tpu.memory_space<vmem>>, vector<16x128xf32>
    %4 = arith.truncf %3 : vector<16x128xf32> to vector<16x128xbf16>
    %c0_2 = arith.constant 0 : index
    %c0_3 = arith.constant 0 : index
    %5 = vector.load %arg4[%c0_2, %c0_3] : memref<128x128xbf16, #tpu.memory_space<vmem>>, vector<128x128xbf16>
    %cst = arith.constant dense<0.000000e+00> : vector<16x128xf32>
    %6 = tpu.matmul %4, %5, %cst {dimension_numbers = #tpu.dot_dimension_numbers<[1], [0], [0], [1], [0, 0, 1, 1], [], []>} : vector<16x128xbf16>, vector<128x128xbf16>, vector<16x128xf32> -> vector<16x128xf32>
    %c0_4 = arith.constant 0 : index
    %c0_5 = arith.constant 0 : index
    %7 = vector.load %arg5[%c0_4, %c0_5] : memref<1x128xf32, #tpu.memory_space<vmem>>, vector<1x128xf32>
    %8 = vector.broadcast %7 : vector<1x128xf32> to vector<16x128xf32>
    %9 = arith.addf %6, %8 : vector<16x128xf32>
    %cst_6 = arith.constant 5.000000e-01 : f32
    %10 = vector.broadcast %cst_6 : f32 to vector<16x128xf32>
    %11 = arith.mulf %10, %9 : vector<16x128xf32>
    %cst_7 = arith.constant 0.707106769 : f32
    %12 = vector.broadcast %cst_7 : f32 to vector<16x128xf32>
    %13 = arith.mulf %9, %12 : vector<16x128xf32>
    %14 = math.erf %13 : vector<16x128xf32>
    %cst_8 = arith.constant 1.000000e+00 : f32
    %15 = vector.broadcast %cst_8 : f32 to vector<16x128xf32>
    %16 = arith.addf %15, %14 : vector<16x128xf32>
    %17 = arith.mulf %11, %16 : vector<16x128xf32>
    %c0_9 = arith.constant 0 : index
    %c0_10 = arith.constant 0 : index
    %18 = vector.load %arg9[%c0_9, %c0_10] : memref<16x128xf32, #tpu.memory_space<vmem>>, vector<16x128xf32>
    %19 = arith.truncf %17 : vector<16x128xf32> to vector<16x128xbf16>
    %c0_11 = arith.constant 0 : index
    %c0_12 = arith.constant 0 : index
    %20 = vector.load %arg6[%c0_11, %c0_12] : memref<128x128xbf16, #tpu.memory_space<vmem>>, vector<128x128xbf16>
    %cst_13 = arith.constant dense<0.000000e+00> : vector<16x128xf32>
    %21 = tpu.matmul %19, %20, %cst_13 {dimension_numbers = #tpu.dot_dimension_numbers<[1], [0], [0], [1], [0, 0, 1, 1], [], []>} : vector<16x128xbf16>, vector<128x128xbf16>, vector<16x128xf32> -> vector<16x128xf32>
    %22 = arith.addf %18, %21 : vector<16x128xf32>
    %c0_14 = arith.constant 0 : index
    %c0_15 = arith.constant 0 : index
    %23 = vector.load %arg9[%c0_14, %c0_15] : memref<16x128xf32, #tpu.memory_space<vmem>>, vector<16x128xf32>
    tpu.vector_store %arg9[%c0_14, %c0_15], %22 {strides = array<i32>} : memref<16x128xf32, #tpu.memory_space<vmem>>, vector<16x128xf32>,
    %c0_i32_16 = arith.constant 0 : i32
    %24 = arith.cmpi eq, %arg2, %c0_i32_16 : i32
    %25 = arith.extui %24 : i1 to i32
    %c0_i32_17 = arith.constant 0 : i32
    %26 = arith.cmpi ne, %25, %c0_i32_17 : i32
    scf.if %26 {
      %c0_18 = arith.constant 0 : index
      %c0_19 = arith.constant 0 : index
      %27 = vector.load %arg9[%c0_18, %c0_19] : memref<16x128xf32, #tpu.memory_space<vmem>>, vector<16x128xf32>
      %c0_20 = arith.constant 0 : index
      %c0_21 = arith.constant 0 : index
      %28 = vector.load %arg8[%c0_20, %c0_21] : memref<16x128xf32, #tpu.memory_space<vmem>>, vector<16x128xf32>
      tpu.vector_store %arg8[%c0_20, %c0_21], %27 {strides = array<i32>} : memref<16x128xf32, #tpu.memory_space<vmem>>, vector<16x128xf32>,
    } else {
    }
    return
  }
  func.func @transform_0(%arg0: i32, %arg1: i32, %arg2: i32) -> (i32, i32) {
    %c0_i32 = arith.constant 0 : i32
    %c0_i32_0 = arith.constant 0 : i32
    return %arg0, %c0_i32 : i32, i32
  }
  func.func @transform_1(%arg0: i32, %arg1: i32, %arg2: i32) -> (i32, i32) {
    %c0_i32 = arith.constant 0 : i32
    %c0_i32_0 = arith.constant 0 : i32
    return %c0_i32, %arg2 : i32, i32
  }
  func.func @transform_2(%arg0: i32, %arg1: i32, %arg2: i32) -> (i32, i32) {
    %c0_i32 = arith.constant 0 : i32
    %c0_i32_0 = arith.constant 0 : i32
    return %c0_i32, %arg2 : i32, i32
  }
  func.func @transform_3(%arg0: i32, %arg1: i32, %arg2: i32) -> (i32, i32) {
    %c0_i32 = arith.constant 0 : i32
    return %arg2, %arg1 : i32, i32
  }
  func.func @transform_4(%arg0: i32, %arg1: i32, %arg2: i32) -> (i32, i32) {
    %c0_i32 = arith.constant 0 : i32
    %c0_i32_0 = arith.constant 0 : i32
    return %c0_i32, %arg1 : i32, i32
  }
  func.func @transform_5(%arg0: i32, %arg1: i32, %arg2: i32) -> (i32, i32) {
    %c0_i32 = arith.constant 0 : i32
    return %arg0, %arg1 : i32, i32
  }
}

</mosaic_0001>

<llo_original>
// kernel: tpu_custom_call.1
$region0: #{tpu_custom_call.1}
  #allocation0 [shape = 'u32[]', space=smem, size = 0x4, offset = 0x4, fixed_abs, tag = 'smem constant byte address 0x4 - core index']
  #allocation1 [shape = 'u32[144,128]{1,0:T(1,128)}', space=vmem, size = 0x12000, scoped, tag = 'internal scratch']
  #allocation2 [shape = 'f32[16,128]{1,0:T(8,128)}', space=vmem, size = 0x2000, scoped, tag = 'scratch operand']
  %s0 = inlined_call_operand.hbm [shape: f32[16,128], index: 0, kind: input, shape index: {}]
  %s1 = inlined_call_operand.hbm [shape: bf16[128,128], index: 1, kind: input, shape index: {}]
  %s2 = inlined_call_operand.vmem [shape: f32[1,128], index: 2, kind: input, shape index: {}]
  %s3 = inlined_call_operand.hbm [shape: bf16[128,128], index: 3, kind: input, shape index: {}]
  %s4 = inlined_call_operand.vmem [shape: f32[1,128], index: 4, kind: input, shape index: {}]
  %s5 = inlined_call_operand.hbm [shape: f32[16,128], index: 5, kind: output, shape index: {}]
  %s6 = sld [smem:[#allocation0]]
  $region50: #{tpu_custom_call.1} parent=0
    _
  %s8 = ssub.s32 1, %s6
  %s9 = scalar_select 0, %s8, %s6
  $region1: #{tpu_custom_call.1} parent=0
    #allocation3 [shape = 'u8[8192]{0}', space=vmem, size = 0x2000, scoped, tag = 'input window, operand 0, single buffered']
    #allocation4 [shape = 's32[1]{0}', space=sflag, size = 0x4, scoped, tag = 'scoped memory for tpu_custom_call.1']
    #allocation5 [shape = 's32[1]{0}', space=sflag, size = 0x4, scoped, tag = 'scoped memory for tpu_custom_call.1']
    #allocation6 [shape = 'u8[32768]{0}', space=vmem, size = 0x8000, scoped, tag = 'input window, operand 1, single buffered']
    #allocation7 [shape = 's32[1]{0}', space=sflag, size = 0x4, scoped, tag = 'scoped memory for tpu_custom_call.1']
    #allocation8 [shape = 'u8[32768]{0}', space=vmem, size = 0x8000, scoped, tag = 'input window, operand 3, single buffered']
    #allocation9 [shape = 'u8[8192]{0}', space=vmem, size = 0x2000, scoped, tag = 'output window, operand 0, single buffered']
    %10 = vsyncpa [#allocation4], 0
    %11 = vsyncpa [#allocation7], 0
    %12 = vsyncpa [#allocation5], 0
    // Predicated region
    $region2: #{tpu_custom_call.1} parent=1 // pred_check
      _
    $region3: #{tpu_custom_call.1} parent=1 // pred_check_branch
      %14 = sbr.rel (0) target = $region5
    $region4: #{tpu_custom_call.1} parent=1 // pred_region
      %s16 = ssub.s32 256, 256
      %17 = vsyncadd [#allocation4], %s16
      %s18 = sshll.u32 [#allocation3], 4
      %s19 = int_to_ptr.vmem [resolvable:$true] %s18
      %24 = dma.hbm_to_vmem [thread:$0]  %s0, 256, %s19, [#allocation4], 128, 128, 8
    $region5: #{tpu_custom_call.1} parent=1 // pred_fallthru
      _
    // Predicated region
    $region6: #{tpu_custom_call.1} parent=1 // pred_check
      _
    $region7: #{tpu_custom_call.1} parent=1 // pred_check_branch
      %26 = sbr.rel (0) target = $region9
    $region8: #{tpu_custom_call.1} parent=1 // pred_region
      %s28 = ssub.s32 1024, 1024
      %29 = vsyncadd [#allocation7], %s28
      %s30 = sshll.u32 [#allocation6], 4
      %s31 = int_to_ptr.vmem [resolvable:$true] %s30
      %36 = dma.hbm_to_vmem [thread:$0]  %s1, 1024, %s31, [#allocation7], 64, 64, 4
    $region9: #{tpu_custom_call.1} parent=1 // pred_fallthru
      _
    // Predicated region
    $region10: #{tpu_custom_call.1} parent=1 // pred_check
      _
    $region11: #{tpu_custom_call.1} parent=1 // pred_check_branch
      %38 = sbr.rel (0) target = $region13
    $region12: #{tpu_custom_call.1} parent=1 // pred_region
      _
    $region13: #{tpu_custom_call.1} parent=1 // pred_fallthru
      _
    // Predicated region
    $region14: #{tpu_custom_call.1} parent=1 // pred_check
      _
    $region15: #{tpu_custom_call.1} parent=1 // pred_check_branch
      %40 = sbr.rel (0) target = $region17
    $region16: #{tpu_custom_call.1} parent=1 // pred_region
      %s42 = ssub.s32 1024, 1024
      %43 = vsyncadd [#allocation7], %s42
      %s44 = sshll.u32 [#allocation8], 4
      %s45 = int_to_ptr.vmem [resolvable:$true] %s44
      %50 = dma.hbm_to_vmem [thread:$0]  %s3, 1024, %s45, [#allocation7], 64, 64, 4
    $region17: #{tpu_custom_call.1} parent=1 // pred_fallthru
      _
    // Predicated region
    $region18: #{tpu_custom_call.1} parent=1 // pred_check
      _
    $region19: #{tpu_custom_call.1} parent=1 // pred_check_branch
      %52 = sbr.rel (0) target = $region21
    $region20: #{tpu_custom_call.1} parent=1 // pred_region
      _
    $region21: #{tpu_custom_call.1} parent=1 // pred_fallthru
      _
    // Predicated region
    $region22: #{tpu_custom_call.1} parent=1 // pred_check
      _
    $region23: #{tpu_custom_call.1} parent=1 // pred_check_branch
      %54 = sbr.rel (0) target = $region25
    $region24: #{tpu_custom_call.1} parent=1 // pred_region
      %55 = dma.done [#allocation4], 256
    $region25: #{tpu_custom_call.1} parent=1 // pred_fallthru
      _
    // Predicated region
    $region26: #{tpu_custom_call.1} parent=1 // pred_check
      _
    $region27: #{tpu_custom_call.1} parent=1 // pred_check_branch
      %57 = sbr.rel (0) target = $region29
    $region28: #{tpu_custom_call.1} parent=1 // pred_region
      %58 = dma.done [#allocation7], 1024
    $region29: #{tpu_custom_call.1} parent=1 // pred_fallthru
      _
    // Predicated region
    $region30: #{tpu_custom_call.1} parent=1 // pred_check
      _
    $region31: #{tpu_custom_call.1} parent=1 // pred_check_branch
      %60 = sbr.rel (0) target = $region33
    $region32: #{tpu_custom_call.1} parent=1 // pred_region
      %61 = dma.done [#allocation7], 1024
    $region33: #{tpu_custom_call.1} parent=1 // pred_fallthru
      _
    %p63 = scmp.eq.s32.totalorder 0, 0
    // Predicated region
    $region34: #{tpu_custom_call.1} parent=1 // pred_check
      %p64 = pneg %p63
    $region35: #{tpu_custom_call.1} parent=1 // pred_check_branch
      %66 = sbr.rel (%p64) target = $region37
    $region36: #{tpu_custom_call.1} parent=1 // pred_region
      %v67 = vld [vmem:[%s4] sm:$0x1]
      %v69 = vlaneseq
      %v70 = vshrl.u32 %v69, 7
      %v71 = vsub.s32 0, %v70
      %v72 = vrot.slane %v67, %v71
      %74 = vst [vmem:[#allocation2] sm:$0xff] %v72
      %75 = vst [vmem:[#allocation2 + $0x8] sm:$0xff] %v72
    $region37: #{tpu_custom_call.1} parent=1 // pred_fallthru
      _
    %v76 = vld [vmem:[#allocation3] sm:$0xff]
    %v77 = vld [vmem:[#allocation3 + $0x8] sm:$0xff]
    %v78 = vpack.c.bf16 %v77, %v76
    %v79 = vld [vmem:[#allocation6] sm:$0xf]
    %v80 = vld [vmem:[#allocation6 + $0x4] sm:$0xf]
    %v81 = vld [vmem:[#allocation6 + $0x8] sm:$0xf]
    %v82 = vld [vmem:[#allocation6 + $0xc] sm:$0xf]
    %v83 = vld [vmem:[#allocation6 + $0x10] sm:$0xf]
    %v84 = vld [vmem:[#allocation6 + $0x14] sm:$0xf]
    %v85 = vld [vmem:[#allocation6 + $0x18] sm:$0xf]
    %v86 = vld [vmem:[#allocation6 + $0x1c] sm:$0xf]
    %v87 = vld [vmem:[#allocation6 + $0x20] sm:$0xf]
    %v88 = vld [vmem:[#allocation6 + $0x24] sm:$0xf]
    %v89 = vld [vmem:[#allocation6 + $0x28] sm:$0xf]
    %v90 = vld [vmem:[#allocation6 + $0x2c] sm:$0xf]
    %v91 = vld [vmem:[#allocation6 + $0x30] sm:$0xf]
    %v92 = vld [vmem:[#allocation6 + $0x34] sm:$0xf]
    %v93 = vld [vmem:[#allocation6 + $0x38] sm:$0xf]
    %v94 = vld [vmem:[#allocation6 + $0x3c] sm:$0xf]
    %v95 = vld [vmem:[%s2] sm:$0x1]
    %v97 = vlaneseq
    %v98 = vshrl.u32 %v97, 7
    %v99 = vsub.s32 0, %v98
    %v100 = vrot.slane %v95, %v99
    %v118 = vunpack.c.l.b16 %v79
    %v119 = vunpack.c.l.b16 %v80
    %v120 = vunpack.c.l.b16 %v81
    %v121 = vunpack.c.l.b16 %v82
    %v122 = vunpack.c.l.b16 %v83
    %v123 = vunpack.c.l.b16 %v84
    %v124 = vunpack.c.l.b16 %v85
    %v125 = vunpack.c.l.b16 %v86
    %v126 = vunpack.c.l.b16 %v87
    %v127 = vunpack.c.l.b16 %v88
    %v128 = vunpack.c.l.b16 %v89
    %v129 = vunpack.c.l.b16 %v90
    %v130 = vunpack.c.l.b16 %v91
    %v131 = vunpack.c.l.b16 %v92
    %v132 = vunpack.c.l.b16 %v93
    %v133 = vunpack.c.l.b16 %v94
    %v134 = vpack.c.b16 %v119, %v118
    %v135 = vpack.c.b16 %v121, %v120
    %v136 = vpack.c.b16 %v123, %v122
    %v137 = vpack.c.b16 %v125, %v124
    %v138 = vpack.c.b16 %v127, %v126
    %v139 = vpack.c.b16 %v129, %v128
    %v140 = vpack.c.b16 %v131, %v130
    %v141 = vpack.c.b16 %v133, %v132
    %150 = vmatprep.subr.bf16.mxu0 0
    %151 = vmatpush1.bf16.msra.mxu0 %v141
    %152 = vmatprep.subr.bf16.mxu0 0
    %153 = vmatpush1.bf16.msra.mxu0 %v140
    %154 = vmatprep.subr.bf16.mxu0 0
    %155 = vmatpush1.bf16.msra.mxu0 %v139
    %156 = vmatprep.subr.bf16.mxu0 0
    %157 = vmatpush1.bf16.msra.mxu0 %v138
    %158 = vmatprep.subr.bf16.mxu0 0
    %159 = vmatpush1.bf16.msra.mxu0 %v137
    %160 = vmatprep.subr.bf16.mxu0 0
    %161 = vmatpush1.bf16.msra.mxu0 %v136
    %162 = vmatprep.subr.bf16.mxu0 0
    %163 = vmatpush1.bf16.msra.mxu0 %v135
    %164 = vmatprep.subr.bf16.mxu0 0
    %165 = vmatpush1.bf16.msra.mxu0 %v134
    %166 = vmatprep.subr.bf16.mxu0 0
    %167 = vmatpush2.bf16.msra.mxu0 0
    %168 = vmatprep.subr.bf16.mxu0 0
    %169 = vmatpush2.bf16.msra.mxu0 0
    %170 = vmatprep.subr.bf16.mxu0 0
    %171 = vmatpush2.bf16.msra.mxu0 0
    %172 = vmatprep.subr.bf16.mxu0 0
    %173 = vmatpush2.bf16.msra.mxu0 0
    %174 = vmatprep.subr.bf16.mxu0 0
    %175 = vmatpush2.bf16.msra.mxu0 0
    %176 = vmatprep.subr.bf16.mxu0 0
    %177 = vmatpush2.bf16.msra.mxu0 0
    %178 = vmatprep.subr.bf16.mxu0 0
    %179 = vmatpush2.bf16.msra.mxu0 0
    %180 = vmatprep.subr.bf16.mxu0 0
    %181 = vmatpush2.bf16.msra.mxu0 0
    %182 = vmatprep.mubr.bf16.mxu0 0
    %183 = vmatmul.mubr.bf16.gmra.mxu0 %v78
    %v184 = vpop.f32.mrf.mxu0
    %v185 = vadd.f32 %v100, %v184
    %v186 = vpop.f32.mrf.mxu0
    %v187 = vpop.f32.mrf.mxu0
    %v188 = vadd.f32 %v100, %v187
    %v189 = vpop.f32.mrf.mxu0
    %190 = vdwg.mxu0
    %v191 = vmul.f32 %v185, 0.5
    %v192 = vmul.f32 %v188, 0.5
    %v193 = vmul.f32 %v185, 0.70710677
    %v194 = vmul.f32 %v188, 0.70710677
    %v195 = verf.f32.pop %v193
    %v196 = verf.f32.pop %v194
    %v197 = vadd.f32 %v195, 1.0
    %v198 = vadd.f32 %v196, 1.0
    %v199 = vmul.f32 %v191, %v197
    %v200 = vmul.f32 %v192, %v198
    %v201 = vld [vmem:[#allocation2] sm:$0xff]
    %v202 = vld [vmem:[#allocation2 + $0x8] sm:$0xff]
    %v203 = vpack.c.bf16 %v200, %v199
    %v204 = vld [vmem:[#allocation8] sm:$0xf]
    %v205 = vld [vmem:[#allocation8 + $0x4] sm:$0xf]
    %v206 = vld [vmem:[#allocation8 + $0x8] sm:$0xf]
    %v207 = vld [vmem:[#allocation8 + $0xc] sm:$0xf]
    %v208 = vld [vmem:[#allocation8 + $0x10] sm:$0xf]
    %v209 = vld [vmem:[#allocation8 + $0x14] sm:$0xf]
    %v210 = vld [vmem:[#allocation8 + $0x18] sm:$0xf]
    %v211 = vld [vmem:[#allocation8 + $0x1c] sm:$0xf]
    %v212 = vld [vmem:[#allocation8 + $0x20] sm:$0xf]
    %v213 = vld [vmem:[#allocation8 + $0x24] sm:$0xf]
    %v214 = vld [vmem:[#allocation8 + $0x28] sm:$0xf]
    %v215 = vld [vmem:[#allocation8 + $0x2c] sm:$0xf]
    %v216 = vld [vmem:[#allocation8 + $0x30] sm:$0xf]
    %v217 = vld [vmem:[#allocation8 + $0x34] sm:$0xf]
    %v218 = vld [vmem:[#allocation8 + $0x38] sm:$0xf]
    %v219 = vld [vmem:[#allocation8 + $0x3c] sm:$0xf]
    %v236 = vunpack.c.l.b16 %v204
    %v237 = vunpack.c.l.b16 %v205
    %v238 = vunpack.c.l.b16 %v206
    %v239 = vunpack.c.l.b16 %v207
    %v240 = vunpack.c.l.b16 %v208
    %v241 = vunpack.c.l.b16 %v209
    %v242 = vunpack.c.l.b16 %v210
    %v243 = vunpack.c.l.b16 %v211
    %v244 = vunpack.c.l.b16 %v212
    %v245 = vunpack.c.l.b16 %v213
    %v246 = vunpack.c.l.b16 %v214
    %v247 = vunpack.c.l.b16 %v215
    %v248 = vunpack.c.l.b16 %v216
    %v249 = vunpack.c.l.b16 %v217
    %v250 = vunpack.c.l.b16 %v218
    %v251 = vunpack.c.l.b16 %v219
    %v252 = vpack.c.b16 %v237, %v236
    %v253 = vpack.c.b16 %v239, %v238
    %v254 = vpack.c.b16 %v241, %v240
    %v255 = vpack.c.b16 %v243, %v242
    %v256 = vpack.c.b16 %v245, %v244
    %v257 = vpack.c.b16 %v247, %v246
    %v258 = vpack.c.b16 %v249, %v248
    %v259 = vpack.c.b16 %v251, %v250
    %268 = vmatprep.subr.bf16.mxu0 0
    %269 = vmatpush1.bf16.msra.mxu0 %v259
    %270 = vmatprep.subr.bf16.mxu0 0
    %271 = vmatpush1.bf16.msra.mxu0 %v258
    %272 = vmatprep.subr.bf16.mxu0 0
    %273 = vmatpush1.bf16.msra.mxu0 %v257
    %274 = vmatprep.subr.bf16.mxu0 0
    %275 = vmatpush1.bf16.msra.mxu0 %v256
    %276 = vmatprep.subr.bf16.mxu0 0
    %277 = vmatpush1.bf16.msra.mxu0 %v255
    %278 = vmatprep.subr.bf16.mxu0 0
    %279 = vmatpush1.bf16.msra.mxu0 %v254
    %280 = vmatprep.subr.bf16.mxu0 0
    %281 = vmatpush1.bf16.msra.mxu0 %v253
    %282 = vmatprep.subr.bf16.mxu0 0
    %283 = vmatpush1.bf16.msra.mxu0 %v252
    %284 = vmatprep.subr.bf16.mxu0 0
    %285 = vmatpush2.bf16.msra.mxu0 0
    %286 = vmatprep.subr.bf16.mxu0 0
    %287 = vmatpush2.bf16.msra.mxu0 0
    %288 = vmatprep.subr.bf16.mxu0 0
    %289 = vmatpush2.bf16.msra.mxu0 0
    %290 = vmatprep.subr.bf16.mxu0 0
    %291 = vmatpush2.bf16.msra.mxu0 0
    %292 = vmatprep.subr.bf16.mxu0 0
    %293 = vmatpush2.bf16.msra.mxu0 0
    %294 = vmatprep.subr.bf16.mxu0 0
    %295 = vmatpush2.bf16.msra.mxu0 0
    %296 = vmatprep.subr.bf16.mxu0 0
    %297 = vmatpush2.bf16.msra.mxu0 0
    %298 = vmatprep.subr.bf16.mxu0 0
    %299 = vmatpush2.bf16.msra.mxu0 0
    %300 = vmatprep.mubr.bf16.mxu0 0
    %301 = vmatmul.mubr.bf16.gmra.mxu0 %v203
    %v302 = vpop.f32.mrf.mxu0
    %v303 = vadd.f32 0.0, %v302
    %v304 = vpop.f32.mrf.mxu0
    %v305 = vpop.f32.mrf.mxu0
    %v306 = vadd.f32 0.0, %v305
    %v307 = vpop.f32.mrf.mxu0
    %308 = vdwg.mxu0
    %v309 = vadd.f32 %v201, %v303
    %v310 = vadd.f32 %v202, %v306
    %311 = vst [vmem:[#allocation2] sm:$0xff] %v309
    %312 = vst [vmem:[#allocation2 + $0x8] sm:$0xff] %v310
    // Predicated region
    $region38: #{tpu_custom_call.1} parent=1 // pred_check
      %p313 = pneg %p63
    $region39: #{tpu_custom_call.1} parent=1 // pred_check_branch
      %315 = sbr.rel (%p313) target = $region41
    $region40: #{tpu_custom_call.1} parent=1 // pred_region
      %v316 = vld [vmem:[#allocation2] sm:$0xff]
      %v317 = vld [vmem:[#allocation2 + $0x8] sm:$0xff]
      %318 = vst [vmem:[#allocation9] sm:$0xff] %v316
      %319 = vst [vmem:[#allocation9 + $0x8] sm:$0xff] %v317
    $region41: #{tpu_custom_call.1} parent=1 // pred_fallthru
      _
    // Predicated region
    $region42: #{tpu_custom_call.1} parent=1 // pred_check
      _
    $region43: #{tpu_custom_call.1} parent=1 // pred_check_branch
      %321 = sbr.rel (0) target = $region45
    $region44: #{tpu_custom_call.1} parent=1 // pred_region
      %s323 = ssub.s32 256, 256
      %324 = vsyncadd [#allocation5], %s323
      %s325 = sshll.u32 [#allocation9], 4
      %s326 = int_to_ptr.vmem [resolvable:$true] %s325
      %331 = dma.vmem_to_hbm [thread:$0]  %s326, 256, %s5, [#allocation5], 128, 128, 8
    $region45: #{tpu_custom_call.1} parent=1 // pred_fallthru
      _
    // Predicated region
    $region46: #{tpu_custom_call.1} parent=1 // pred_check
      _
    $region47: #{tpu_custom_call.1} parent=1 // pred_check_branch
      %333 = sbr.rel (0) target = $region49
    $region48: #{tpu_custom_call.1} parent=1 // pred_region
      %334 = dma.done [#allocation5], 256
    $region49: #{tpu_custom_call.1} parent=1 // pred_fallthru
      _
    %335 = vsyncpa [#allocation4], 1
    %336 = vsyncpa [#allocation7], 1
    %337 = vsyncpa [#allocation5], 1

</llo_original>
